<compile_context>
chip_gen: v7x
topology: tpu7x:2x2x1
jax: 0.10.0
libtpu: 0.0.40
codegen_flags: <defaults>
</compile_context>

<pallas_src>
import functools

import jax
import jax.numpy as jnp
from jax.experimental import pallas as pl
from jax.experimental.pallas import tpu as pltpu


def _round_up(n, m):
    return ((n + m - 1) // m) * m


def _sublane_multiple(dtype):
    # rows per packed vreg group: f32 -> 8, bf16 -> 16, int8/fp8 -> 32
    itemsize = jnp.dtype(dtype).itemsize
    return max(8, 32 // max(itemsize, 1))


def _vmem_capacity_bytes():
    try:
        return int(pltpu.get_tpu_info().vmem_capacity_bytes)
    except Exception:
        return 64 * 1024 * 1024  # conservative: v7x per-TensorCore VMEM


# ----------------------------------------------------------------------------- kernel
def _linear_kernel(x_ref, w_ref, b_ref, o_ref):
    # x: (TB, D) @ w: (D, TC) -> (TB, TC); f32 accumulation on the MXU.
    acc = jnp.dot(x_ref[...], w_ref[...], preferred_element_type=jnp.float32)
    o_ref[...] = (acc + b_ref[...]).astype(o_ref.dtype)


# ----------------------------------------------------------------------------- param prep (once)
def prepare_feat_classifier_params(weight, bias):
    """One-time parameter prep, amortized across all forward calls.

    weight: (C, D) PyTorch nn.Linear layout, bias: (C,)
    Returns (w_t, b2d, class_num):
      w_t : (D, C_pad)  transposed, class dim lane-dense and zero-padded
      b2d : (1, C_pad)
    """
    C, D = weight.shape
    C_pad = 128 if C <= 128 else _round_up(C, 256)
    w_t = jnp.asarray(weight).T  # (D, C)
    b = jnp.asarray(bias)
    if C_pad != C:
        w_t = jnp.pad(w_t, ((0, 0), (0, C_pad - C)))
        b = jnp.pad(b, (0, C_pad - C))
    return w_t, b.reshape(1, C_pad), C


# ----------------------------------------------------------------------------- forward
@functools.partial(jax.jit, static_argnames=("class_num", "block_b", "block_c"))
def feat_classifier_forward(x, w_t, b2d, *, class_num=None, block_b=1024, block_c=256):
    """x: (B, D), w_t: (D, C_pad) [pre-transposed/padded], b2d: (1, C_pad) -> (B, class_num)."""
    B, D = x.shape
    D_w, C_pad = w_t.shape
    assert D == D_w, "feature dim mismatch"

    # class tile: 256 keeps the 2x256^2 MXU (v6e/v7x) full; prep guarantees
    # C_pad is a multiple of 256 (or exactly 128), so tc always divides C_pad.
    tc = 256 if (C_pad % 256 == 0 and block_c >= 256) else 128

    sub = _sublane_multiple(x.dtype)
    B8 = _round_up(B, sub)

    # batch tile: grow tb in preference to tc (W is re-streamed once per batch
    # tile), within a conservative slice of this generation's VMEM.
    itemsize = jnp.dtype(x.dtype).itemsize
    budget = _vmem_capacity_bytes() // 8  # leave headroom for compiler scratch
    tb_cap = (budget // (2 * itemsize) - D * tc) // (D + tc)
    tb_cap = max(sub, (tb_cap // sub) * sub)
    tb = min(_round_up(min(block_b, B8), sub), tb_cap)
    B_pad = _round_up(B8, tb)

    # v7x has 2 TensorCores: give a medium-size problem >= 2 "parallel" blocks.
    if B_pad // tb == 1 and C_pad // tc == 1:
        if B_pad >= 2 * sub:
            tb = _round_up(pl.cdiv(B_pad, 2), sub)
            B_pad = _round_up(B8, tb)
        elif C_pad >= 256:
            tc = 128

    grid = (B_pad // tb, C_pad // tc)

    x_p = x if B_pad == B else jnp.pad(x, ((0, B_pad - B), (0, 0)))

    out = pl.pallas_call(
        _linear_kernel,
        out_shape=jax.ShapeDtypeStruct((B_pad, C_pad), x.dtype),
        grid_spec=pl.GridSpec(
            grid=grid,
            in_specs=[
                pl.BlockSpec((tb, D), lambda i, j: (i, 0)),   # x row block
                pl.BlockSpec((D, tc), lambda i, j: (0, j)),   # W column block, (D, C) layout
                pl.BlockSpec((1, tc), lambda i, j: (0, j)),   # bias block
            ],
            out_specs=pl.BlockSpec((tb, tc), lambda i, j: (i, j)),
        ),
        compiler_params=pltpu.CompilerParams(
            dimension_semantics=("parallel", "parallel"),
        ),
        cost_estimate=pl.CostEstimate(
            flops=2 * B_pad * D * C_pad,
            transcendentals=0,
            bytes_accessed=itemsize * (
                B_pad * D                      # x read once
                + grid[0] * C_pad * D          # W re-streamed per batch tile
                + B_pad * C_pad                # output writeback
                + grid[0] * C_pad              # bias re-read per batch tile
            ),
        ),
    )(x_p, w_t, b2d)

    C_out = C_pad if class_num is None else class_num
    if B_pad == B and C_out == C_pad:
        return out
    return out[:B, :C_out]


# ----------------------------------------------------------------------------- synthetic init
def make_feat_classifier_params(key, class_num, bottleneck_dim=256, type="linear"):
    """Deterministic synthetic init mirroring nn.Linear / weight_norm shapes."""
    k_w, k_b, k_g = jax.random.split(key, 3)
    bound = 1.0 / jnp.sqrt(bottleneck_dim)
    v = jax.random.uniform(k_w, (class_num, bottleneck_dim), jnp.float32, -bound, bound)
    bias = jax.random.uniform(k_b, (class_num,), jnp.float32, -bound, bound)
    if type == "wn":
        # weight_norm(name='weight', dim=0): W = g * v / ||v|| per output row.
        g = jax.random.uniform(k_g, (class_num, 1), jnp.float32, 0.5, 1.5)
        norm = jnp.sqrt(jnp.sum(v * v, axis=1, keepdims=True))
        weight = g * v / norm
    else:
        weight = v
    return weight, bias


if __name__ == "__main__":
    key = jax.random.PRNGKey(0)
    k_x, k_p = jax.random.split(key)

    B, D, C = 16, 256, 10  # batch, bottleneck_dim, class_num
    x = jax.random.normal(k_x, (B, D), jnp.float32)
    hp = jax.lax.Precision.HIGHEST

    # default type='linear'
    weight, bias = make_feat_classifier_params(k_p, class_num=C, bottleneck_dim=D, type="linear")
    w_t, b2d, _ = prepare_feat_classifier_params(weight, bias)
    out = jax.block_until_ready(feat_classifier_forward(x, w_t, b2d, class_num=C))
    ref = jnp.dot(x, weight.T, precision=hp) + bias
    assert out.shape == (B, C)
    assert jnp.allclose(out, ref, atol=1e-4, rtol=1e-4)

    # 'wn' variant (weight_norm reparam handled once at init, same Pallas matmul)
    w_wn, b_wn = make_feat_classifier_params(k_p, class_num=C, bottleneck_dim=D, type="wn")
    wt_wn, b2d_wn, _ = prepare_feat_classifier_params(w_wn, b_wn)
    out_wn = jax.block_until_ready(feat_classifier_forward(x, wt_wn, b2d_wn, class_num=C))
    ref_wn = jnp.dot(x, w_wn.T, precision=hp) + b_wn
    assert jnp.allclose(out_wn, ref_wn, atol=1e-4, rtol=1e-4)

    # odd batch size (exercises tail padding path; no divisibility assert)
    x_odd = jax.random.normal(k_x, (13, D), jnp.float32)
    out_odd = jax.block_until_ready(feat_classifier_forward(x_odd, w_t, b2d, class_num=C))
    ref_odd = jnp.dot(x_odd, weight.T, precision=hp) + bias
    assert out_odd.shape == (13, C)
    assert jnp.allclose(out_odd, ref_odd, atol=1e-4, rtol=1e-4)

    print("KERNEL_OK")
</pallas_src>

<mosaic_0001>
module attributes {stable_mosaic.version = 11 : i64} {
  func.func @_linear_kernel(%arg0: i32, %arg1: i32, %arg2: memref<8x256xf32, #tpu.memory_space<vmem>>, %arg3: memref<256x128xf32, #tpu.memory_space<vmem>>, %arg4: memref<1x128xf32, #tpu.memory_space<vmem>>, %arg5: memref<8x128xf32, #tpu.memory_space<vmem>>) attributes {dimension_semantics = [#tpu.dimension_semantics<parallel>, #tpu.dimension_semantics<parallel>], iteration_bounds = array<i64: 2, 1>, scalar_prefetch = 0 : i64, scratch_operands = 0 : i64, tpu.core_type = #tpu.core_type<tc>, window_params = [{transform_indices = @transform_0, window_bounds = array<i64: 8, 256>}, {transform_indices = @transform_1, window_bounds = array<i64: 256, 128>}, {transform_indices = @transform_2, window_bounds = array<i64: 1, 128>}, {transform_indices = @transform_3, window_bounds = array<i64: 8, 128>}]} {
    %c0 = arith.constant 0 : index
    %c0_0 = arith.constant 0 : index
    %0 = vector.load %arg2[%c0, %c0_0] : memref<8x256xf32, #tpu.memory_space<vmem>>, vector<8x256xf32>
    %c0_1 = arith.constant 0 : index
    %c0_2 = arith.constant 0 : index
    %1 = vector.load %arg3[%c0_1, %c0_2] : memref<256x128xf32, #tpu.memory_space<vmem>>, vector<256x128xf32>
    %cst = arith.constant dense<0.000000e+00> : vector<8x128xf32>
    %2 = tpu.matmul %0, %1, %cst {dimension_numbers = #tpu.dot_dimension_numbers<[1], [0], [0], [1], [0, 0, 1, 1], [], []>} : vector<8x256xf32>, vector<256x128xf32>, vector<8x128xf32> -> vector<8x128xf32>
    %c0_3 = arith.constant 0 : index
    %c0_4 = arith.constant 0 : index
    %3 = vector.load %arg4[%c0_3, %c0_4] : memref<1x128xf32, #tpu.memory_space<vmem>>, vector<1x128xf32>
    %4 = vector.broadcast %3 : vector<1x128xf32> to vector<8x128xf32>
    %5 = arith.addf %2, %4 : vector<8x128xf32>
    %c0_5 = arith.constant 0 : index
    %c0_6 = arith.constant 0 : index
    %6 = vector.load %arg5[%c0_5, %c0_6] : memref<8x128xf32, #tpu.memory_space<vmem>>, vector<8x128xf32>
    tpu.vector_store %arg5[%c0_5, %c0_6], %5 {strides = array<i32>} : memref<8x128xf32, #tpu.memory_space<vmem>>, vector<8x128xf32>,
    return
  }
  func.func @transform_0(%arg0: i32, %arg1: i32) -> (i32, i32) {
    %c0_i32 = arith.constant 0 : i32
    %c0_i32_0 = arith.constant 0 : i32
    return %arg0, %c0_i32 : i32, i32
  }
  func.func @transform_1(%arg0: i32, %arg1: i32) -> (i32, i32) {
    %c0_i32 = arith.constant 0 : i32
    %c0_i32_0 = arith.constant 0 : i32
    return %c0_i32, %arg1 : i32, i32
  }
  func.func @transform_2(%arg0: i32, %arg1: i32) -> (i32, i32) {
    %c0_i32 = arith.constant 0 : i32
    %c0_i32_0 = arith.constant 0 : i32
    return %c0_i32, %arg1 : i32, i32
  }
  func.func @transform_3(%arg0: i32, %arg1: i32) -> (i32, i32) {
    %c0_i32 = arith.constant 0 : i32
    return %arg0, %arg1 : i32, i32
  }
}

</mosaic_0001>

<llo_original>
// kernel: feat_classifier_forward.1
$region0: #{feat_classifier_forward.1}
  #allocation0 [shape = 'u32[]', space=smem, size = 0x4, offset = 0x4, fixed_abs, tag = 'smem constant byte address 0x4 - core index']
  #allocation1 [shape = 'u32[144,128]{1,0:T(1,128)}', space=vmem, size = 0x12000, scoped, tag = 'internal scratch']
  %s0 = inlined_call_operand.hbm [shape: f32[16,256], index: 0, kind: input, shape index: {}]
  %s1 = inlined_call_operand.hbm [shape: f32[256,128], index: 1, kind: input, shape index: {}]
  %s2 = inlined_call_operand.vmem [shape: f32[1,128], index: 2, kind: input, shape index: {}]
  %s3 = inlined_call_operand.hbm [shape: f32[16,128], index: 3, kind: output, shape index: {}]
  %s4 = sld [smem:[#allocation0]]
  $region53: #{feat_classifier_forward.1} parent=0
    _
  %s6 = ssub.s32 1, %s4
  %s7 = scalar_select 0, %s6, %s4
  $region1: #{feat_classifier_forward.1} parent=0
    #allocation2 [shape = 'u8[16384]{0}', space=vmem, size = 0x4000, scoped, tag = 'input window, operand 0']
    #allocation3 [shape = 's32[2]{0}', space=sflag, size = 0x8, scoped, tag = 'scoped memory for feat_classifier_forward.1']
    #allocation4 [shape = 's32[2]{0}', space=sflag, size = 0x8, scoped, tag = 'scoped memory for feat_classifier_forward.1']
    #allocation5 [shape = 'u8[131072]{0}', space=vmem, size = 0x20000, scoped, tag = 'input window, operand 1, single buffered']
    #allocation6 [shape = 's32[1]{0}', space=sflag, size = 0x4, scoped, tag = 'scoped memory for feat_classifier_forward.1']
    #allocation7 [shape = 'u8[8192]{0}', space=vmem, size = 0x2000, scoped, tag = 'output window, operand 0']
    %8 = vsyncpa [#allocation3], 0
    %s9 = scalar_lea.sflag [#allocation3], 1
    %10 = vsyncpa %s9, 0
    %11 = vsyncpa [#allocation6], 0
    %12 = vsyncpa [#allocation4], 0
    %s13 = scalar_lea.sflag [#allocation4], 1
    %14 = vsyncpa %s13, 0
    loop: start=0, step=1, limit=4
    $region2: #{feat_classifier_forward.1} parent=1 // loop_pre_header
      _
    $region3: #{feat_classifier_forward.1} parent=1 // loop_header
      %s16 = sphi 0, %s20
      %p17 = scmp.ge.s32.totalorder %s16, 4
      %s23 = sphi 0, %s35
      %s24 = sphi 0, %s31
      %s25 = sphi 0, %s23
      %s26 = sphi 0, %s24
      %s27 = sphi 0, %s25
      %s28 = sphi 0, %s26
      %s38 = sphi 0, %s40
      %s41 = sphi 0, %s38
      %s42 = sphi 0, %s41
      %s58 = sphi 0, %s42
      %s64 = sphi 0, %s66
      %s67 = sphi 0, %s64
      %s68 = sphi 0, %s67
      %s84 = sphi 0, %s68
      %s90 = sphi 0, %s92
      %s93 = sphi 0, %s90
      %s94 = sphi 0, %s93
      %s110 = sphi 0, %s94
      %s118 = sphi 0, %s120
      %s121 = sphi 0, %s118
      %s122 = sphi 0, %s121
      %s138 = sphi 0, %s122
    $region4: #{feat_classifier_forward.1} parent=1 // loop_header_branch
      %19 = sbr.rel (%p17) target = $region8
    $region5: #{feat_classifier_forward.1} parent=1 // loop_body
      %s21 = ssub.s32 %s16, 1
      %s22 = ssub.s32 %s16, 2
      %s29 = sadd.s32 1, %s24
      %p30 = scmp.ge.s32.totalorder %s29, 1
      %s31 = scalar_select %p30, 0, %s29
      %s32 = sadd.s32 1, %s23
      %s33 = scalar_select %p30, %s32, %s23
      %p34 = scmp.ge.s32.totalorder %s33, 2
      %s35 = scalar_select %p34, 0, %s33
      %s36 = ssub.s32 %s23, %s35
      %p37 = scmp.eq.s32.totalorder %s36, 0
      %s39 = sadd.s32 %s38, 1
      %s40 = scalar_select %p37, %s38, %s39
      %p43 = pneg %p37
      %p44 = scmp.eq.s32.totalorder %s16, 1
      %p45 = por %p43, %p44
      %p46 = scmp.ne.s32.totalorder %s38, %s41
      %p47 = scmp.eq.s32.totalorder %s16, 0
      %p48 = por %p46, %p47
      %p49 = scmp.ne.s32.totalorder %s38, %s41
      %p50 = scmp.eq.s32.totalorder %s21, 1
      %p51 = por %p49, %p50
      %p52 = scmp.ne.s32.totalorder %s41, %s42
      %p53 = scmp.eq.s32.totalorder %s21, 0
      %p54 = por %p52, %p53
      %p55 = scmp.ne.s32.totalorder %s41, %s42
      %p56 = scmp.eq.s32.totalorder %s22, 1
      %p57 = por %p55, %p56
      %p59 = scmp.ne.s32.totalorder %s42, %s58
      %p60 = scmp.eq.s32.totalorder %s22, 0
      %p61 = por %p59, %p60
      %s62 = ssub.s32 %s24, %s31
      %p63 = scmp.eq.s32.totalorder %s62, 0
      %s65 = sadd.s32 %s64, 1
      %s66 = scalar_select %p63, %s64, %s65
      %p69 = pneg %p63
      %p70 = scmp.eq.s32.totalorder %s16, 1
      %p71 = por %p69, %p70
      %p72 = scmp.ne.s32.totalorder %s64, %s67
      %p73 = scmp.eq.s32.totalorder %s16, 0
      %p74 = por %p72, %p73
      %p75 = scmp.ne.s32.totalorder %s64, %s67
      %p76 = scmp.eq.s32.totalorder %s21, 1
      %p77 = por %p75, %p76
      %p78 = scmp.ne.s32.totalorder %s67, %s68
      %p79 = scmp.eq.s32.totalorder %s21, 0
      %p80 = por %p78, %p79
      %p81 = scmp.ne.s32.totalorder %s67, %s68
      %p82 = scmp.eq.s32.totalorder %s22, 1
      %p83 = por %p81, %p82
      %p85 = scmp.ne.s32.totalorder %s68, %s84
      %p86 = scmp.eq.s32.totalorder %s22, 0
      %p87 = por %p85, %p86
      %s88 = ssub.s32 %s24, %s31
      %p89 = scmp.eq.s32.totalorder %s88, 0
      %s91 = sadd.s32 %s90, 1
      %s92 = scalar_select %p89, %s90, %s91
      %p95 = pneg %p89
      %p96 = scmp.eq.s32.totalorder %s16, 1
      %p97 = por %p95, %p96
      %p98 = scmp.ne.s32.totalorder %s90, %s93
      %p99 = scmp.eq.s32.totalorder %s16, 0
      %p100 = por %p98, %p99
      %p101 = scmp.ne.s32.totalorder %s90, %s93
      %p102 = scmp.eq.s32.totalorder %s21, 1
      %p103 = por %p101, %p102
      %p104 = scmp.ne.s32.totalorder %s93, %s94
      %p105 = scmp.eq.s32.totalorder %s21, 0
      %p106 = por %p104, %p105
      %p107 = scmp.ne.s32.totalorder %s93, %s94
      %p108 = scmp.eq.s32.totalorder %s22, 1
      %p109 = por %p107, %p108
      %p111 = scmp.ne.s32.totalorder %s94, %s110
      %p112 = scmp.eq.s32.totalorder %s22, 0
      %p113 = por %p111, %p112
      %s114 = ssub.s32 %s23, %s35
      %s115 = ssub.s32 %s24, %s31
      %s116 = sor.u32 %s114, %s115
      %p117 = scmp.eq.s32.totalorder %s116, 0
      %s119 = sadd.s32 %s118, 1
      %s120 = scalar_select %p117, %s118, %s119
      %p123 = pneg %p117
      %p124 = scmp.eq.s32.totalorder %s16, 1
      %p125 = por %p123, %p124
      %p126 = scmp.ne.s32.totalorder %s118, %s121
      %p127 = scmp.eq.s32.totalorder %s16, 0
      %p128 = por %p126, %p127
      %p129 = scmp.ne.s32.totalorder %s118, %s121
      %p130 = scmp.eq.s32.totalorder %s21, 1
      %p131 = por %p129, %p130
      %p132 = scmp.ne.s32.totalorder %s121, %s122
      %p133 = scmp.eq.s32.totalorder %s21, 0
      %p134 = por %p132, %p133
      %p135 = scmp.ne.s32.totalorder %s121, %s122
      %p136 = scmp.eq.s32.totalorder %s22, 1
      %p137 = por %p135, %p136
      %p139 = scmp.ne.s32.totalorder %s122, %s138
      %p140 = scmp.eq.s32.totalorder %s22, 0
      %p141 = por %p139, %p140
      %p142 = scmp.le.s32.totalorder 1, %s16
      %p143 = scmp.lt.s32.totalorder %s16, 3
      %p144 = pnand %p142, %p143
      %p145 = pneg %p144
      // Predicated region
      $region9: #{feat_classifier_forward.1} parent=5 // pred_check
        _
      $region10: #{feat_classifier_forward.1} parent=5 // pred_check_branch
        %147 = sbr.rel (%p144) target = $region12
      $region11: #{feat_classifier_forward.1} parent=5 // pred_region
        %s148 = ssub.s32 %s16, 1
        // Predicated region
        $region13: #{feat_classifier_forward.1} parent=11 // pred_check
          %p149 = pneg %p80
        $region14: #{feat_classifier_forward.1} parent=11 // pred_check_branch
          %151 = sbr.rel (%p149) target = $region16
        $region15: #{feat_classifier_forward.1} parent=11 // pred_region
          %s153 = ssub.s32 4096, 4096
          %154 = vsyncadd [#allocation6], %s153
          %s155 = smul.addr %s26, 128
          %s156 = scalar_lea.hbm %s1, %s155
          %s157 = sshll.u32 [#allocation5], 4
          %s158 = int_to_ptr.vmem [resolvable:$true] %s157
          %163 = dma.hbm_to_vmem [thread:$0]  %s156, 4096, %s158, [#allocation6], 128, 128, 8
        $region16: #{feat_classifier_forward.1} parent=11 // pred_fallthru
          _
        // Predicated region
        $region17: #{feat_classifier_forward.1} parent=11 // pred_check
          %p164 = pneg %p106
        $region18: #{feat_classifier_forward.1} parent=11 // pred_check_branch
          %166 = sbr.rel (%p164) target = $region20
        $region19: #{feat_classifier_forward.1} parent=11 // pred_region
          %p167 = scmp.lt.s32.totalorder %s26, 0
          %s168 = scalar_select %p167, %s26, 0
          %s169 = scalar_lea.vmem %s2, %s168
        $region20: #{feat_classifier_forward.1} parent=11 // pred_fallthru
          _
      $region12: #{feat_classifier_forward.1} parent=5 // pred_fallthru
        _
      %p170 = scmp.lt.s32.totalorder %s16, 2
      // Predicated region
      $region21: #{feat_classifier_forward.1} parent=5 // pred_check
        %p171 = pneg %p170
      $region22: #{feat_classifier_forward.1} parent=5 // pred_check_branch
        %173 = sbr.rel (%p171) target = $region24
      $region23: #{feat_classifier_forward.1} parent=5 // pred_region
        // Predicated region
        $region25: #{feat_classifier_forward.1} parent=23 // pred_check
          %p174 = pneg %p48
        $region26: #{feat_classifier_forward.1} parent=23 // pred_check_branch
          %176 = sbr.rel (%p174) target = $region28
        $region27: #{feat_classifier_forward.1} parent=23 // pred_region
          %s177 = sand.u32 %s38, 1
          %s178 = scalar_lea.sflag [#allocation3], %s177
          %s179 = sand.u32 %s38, 1
          %s180 = smul.addr %s179, 16
          %s181 = scalar_lea.vmem [#allocation2], %s180
          %s183 = ssub.s32 256, 256
          %184 = vsyncadd %s178, %s183
          %s185 = smul.addr %s23, 2
          %s186 = smul.addr %s185, 128
          %s187 = scalar_lea.hbm %s0, %s186
          %s189 = sshll.u32 %s181, 4
          %s190 = int_to_ptr.vmem [resolvable:$true] %s189
          %192 = dma.hbm_to_vmem [thread:$0]  %s187, 256, %s190, %s178
        $region28: #{feat_classifier_forward.1} parent=23 // pred_fallthru
          _
      $region24: #{feat_classifier_forward.1} parent=5 // pred_fallthru
        _
      %p193 = scmp.le.s32.totalorder 1, %s16
      %p194 = scmp.lt.s32.totalorder %s16, 3
      %p195 = pnand %p193, %p194
      %p196 = pneg %p195
      // Predicated region
      $region29: #{feat_classifier_forward.1} parent=5 // pred_check
        _
      $region30: #{feat_classifier_forward.1} parent=5 // pred_check_branch
        %198 = sbr.rel (%p195) target = $region32
      $region31: #{feat_classifier_forward.1} parent=5 // pred_region
        %s199 = ssub.s32 %s16, 1
        %s200 = sand.u32 %s41, 1
        %s201 = scalar_lea.sflag [#allocation3], %s200
        %s202 = sand.u32 %s41, 1
        %s203 = smul.addr %s202, 16
        %s204 = scalar_lea.vmem [#allocation2], %s203
        // Predicated region
        $region33: #{feat_classifier_forward.1} parent=31 // pred_check
          %p205 = pneg %p54
        $region34: #{feat_classifier_forward.1} parent=31 // pred_check_branch
          %207 = sbr.rel (%p205) target = $region36
        $region35: #{feat_classifier_forward.1} parent=31 // pred_region
          %208 = dma.done %s201, 256
        $region36: #{feat_classifier_forward.1} parent=31 // pred_fallthru
          _
        // Predicated region
        $region37: #{feat_classifier_forward.1} parent=31 // pred_check
          %p209 = pneg %p80
        $region38: #{feat_classifier_forward.1} parent=31 // pred_check_branch
          %211 = sbr.rel (%p209) target = $region40
        $region39: #{feat_classifier_forward.1} parent=31 // pred_region
          %212 = dma.done [#allocation6], 4096
        $region40: #{feat_classifier_forward.1} parent=31 // pred_fallthru
          _
        %s213 = sand.u32 %s41, 1
        %s214 = scalar_lea.sflag [#allocation3], %s213
        %s215 = sand.u32 %s41, 1
        %s216 = smul.addr %s215, 16
        %s217 = scalar_lea.vmem [#allocation2], %s216
        %p218 = pneg %p54
        %p219 = pneg %p51
        %p220 = pneg %p80
        %p221 = pneg %p77
        %p222 = scmp.lt.s32.totalorder %s26, 0
        %s223 = scalar_select %p222, %s26, 0
        %s224 = scalar_lea.vmem %s2, %s223
        %p225 = pneg %p106
        %p226 = pneg %p103
        %p227 = pneg %p134
        %p228 = pneg %p131
        %s229 = sand.u32 %s121, 1
        %s230 = scalar_lea.sflag [#allocation4], %s229
        %s231 = sand.u32 %s121, 1
        %s232 = smul.addr %s231, 8
        %s233 = scalar_lea.vmem [#allocation7], %s232
        %p234 = scmp.lt.s32.totalorder %s26, 0
        %s235 = scalar_select %p234, %s26, 0
        %s236 = scalar_lea.vmem %s2, %s235
        %v237 = vld [vmem:[%s204] sm:$0xff]
        %v238 = vld [vmem:[%s204 + $0x8] sm:$0xff]
        %v239 = vld [vmem:[#allocation5] sm:$0xff]
        %v240 = vld [vmem:[#allocation5 + $0x8] sm:$0xff]
        %v241 = vld [vmem:[#allocation5 + $0x10] sm:$0xff]
        %v242 = vld [vmem:[#allocation5 + $0x18] sm:$0xff]
        %v243 = vld [vmem:[#allocation5 + $0x20] sm:$0xff]
        %v244 = vld [vmem:[#allocation5 + $0x28] sm:$0xff]
        %v245 = vld [vmem:[#allocation5 + $0x30] sm:$0xff]
        %v246 = vld [vmem:[#allocation5 + $0x38] sm:$0xff]
        %v247 = vld [vmem:[#allocation5 + $0x40] sm:$0xff]
        %v248 = vld [vmem:[#allocation5 + $0x48] sm:$0xff]
        %v249 = vld [vmem:[#allocation5 + $0x50] sm:$0xff]
        %v250 = vld [vmem:[#allocation5 + $0x58] sm:$0xff]
        %v251 = vld [vmem:[#allocation5 + $0x60] sm:$0xff]
        %v252 = vld [vmem:[#allocation5 + $0x68] sm:$0xff]
        %v253 = vld [vmem:[#allocation5 + $0x70] sm:$0xff]
        %v254 = vld [vmem:[#allocation5 + $0x78] sm:$0xff]
        %v255 = vld [vmem:[#allocation5 + $0x80] sm:$0xff]
        %v256 = vld [vmem:[#allocation5 + $0x88] sm:$0xff]
        %v257 = vld [vmem:[#allocation5 + $0x90] sm:$0xff]
        %v258 = vld [vmem:[#allocation5 + $0x98] sm:$0xff]
        %v259 = vld [vmem:[#allocation5 + $0xa0] sm:$0xff]
        %v260 = vld [vmem:[#allocation5 + $0xa8] sm:$0xff]
        %v261 = vld [vmem:[#allocation5 + $0xb0] sm:$0xff]
        %v262 = vld [vmem:[#allocation5 + $0xb8] sm:$0xff]
        %v263 = vld [vmem:[#allocation5 + $0xc0] sm:$0xff]
        %v264 = vld [vmem:[#allocation5 + $0xc8] sm:$0xff]
        %v265 = vld [vmem:[#allocation5 + $0xd0] sm:$0xff]
        %v266 = vld [vmem:[#allocation5 + $0xd8] sm:$0xff]
        %v267 = vld [vmem:[#allocation5 + $0xe0] sm:$0xff]
        %v268 = vld [vmem:[#allocation5 + $0xe8] sm:$0xff]
        %v269 = vld [vmem:[#allocation5 + $0xf0] sm:$0xff]
        %v270 = vld [vmem:[#allocation5 + $0xf8] sm:$0xff]
        %v271 = vld [vmem:[%s236] sm:$0x1]
        %v273 = vlaneseq
        %v274 = vshrl.u32 %v273, 7
        %v275 = vsub.s32 0, %v274
        %v276 = vrot.slane %v271, %v275
        %278 = vmatprep.subr.mxu0 0.0
        %279 = vmatpush1.msra.mxu0 %v239
        %280 = vmatprep.subr.mxu0 0.0
        %281 = vmatpush1.msra.mxu0 %v240
        %282 = vmatprep.subr.mxu0 0.0
        %283 = vmatpush1.msra.mxu0 %v241
        %284 = vmatprep.subr.mxu0 0.0
        %285 = vmatpush1.msra.mxu0 %v242
        %286 = vmatprep.subr.mxu0 0.0
        %287 = vmatpush1.msra.mxu0 %v243
        %288 = vmatprep.subr.mxu0 0.0
        %289 = vmatpush1.msra.mxu0 %v244
        %290 = vmatprep.subr.mxu0 0.0
        %291 = vmatpush1.msra.mxu0 %v245
        %292 = vmatprep.subr.mxu0 0.0
        %293 = vmatpush1.msra.mxu0 %v246
        %294 = vmatprep.subr.mxu0 0.0
        %295 = vmatpush1.msra.mxu0 %v247
        %296 = vmatprep.subr.mxu0 0.0
        %297 = vmatpush1.msra.mxu0 %v248
        %298 = vmatprep.subr.mxu0 0.0
        %299 = vmatpush1.msra.mxu0 %v249
        %300 = vmatprep.subr.mxu0 0.0
        %301 = vmatpush1.msra.mxu0 %v250
        %302 = vmatprep.subr.mxu0 0.0
        %303 = vmatpush1.msra.mxu0 %v251
        %304 = vmatprep.subr.mxu0 0.0
        %305 = vmatpush1.msra.mxu0 %v252
        %306 = vmatprep.subr.mxu0 0.0
        %307 = vmatpush1.msra.mxu0 %v253
        %308 = vmatprep.subr.mxu0 0.0
        %309 = vmatpush1.msra.mxu0 %v254
        %310 = vmatprep.subr.mxu0 0.0
        %311 = vmatpush1.msra.mxu0 %v255
        %312 = vmatprep.subr.mxu0 0.0
        %313 = vmatpush1.msra.mxu0 %v256
        %314 = vmatprep.subr.mxu0 0.0
        %315 = vmatpush1.msra.mxu0 %v257
        %316 = vmatprep.subr.mxu0 0.0
        %317 = vmatpush1.msra.mxu0 %v258
        %318 = vmatprep.subr.mxu0 0.0
        %319 = vmatpush1.msra.mxu0 %v259
        %320 = vmatprep.subr.mxu0 0.0
        %321 = vmatpush1.msra.mxu0 %v260
        %322 = vmatprep.subr.mxu0 0.0
        %323 = vmatpush1.msra.mxu0 %v261
        %324 = vmatprep.subr.mxu0 0.0
        %325 = vmatpush1.msra.mxu0 %v262
        %326 = vmatprep.subr.mxu0 0.0
        %327 = vmatpush1.msra.mxu0 %v263
        %328 = vmatprep.subr.mxu0 0.0
        %329 = vmatpush1.msra.mxu0 %v264
        %330 = vmatprep.subr.mxu0 0.0
        %331 = vmatpush1.msra.mxu0 %v265
        %332 = vmatprep.subr.mxu0 0.0
        %333 = vmatpush1.msra.mxu0 %v266
        %334 = vmatprep.subr.mxu0 0.0
        %335 = vmatpush1.msra.mxu0 %v267
        %336 = vmatprep.subr.mxu0 0.0
        %337 = vmatpush1.msra.mxu0 %v268
        %338 = vmatprep.subr.mxu0 0.0
        %339 = vmatpush1.msra.mxu0 %v269
        %340 = vmatprep.subr.mxu0 0.0
        %341 = vmatpush1.msra.mxu0 %v270
        %342 = vmatprep.mubr.f32.mxu0 %v238
        %343 = vmatmul.mubr.f32.gmra.mrb[0].mxu0 %v237
        %v344 = vpop.f32.mrb[0].mxu0
        %v345 = vadd.f32 %v276, %v344
        %v346 = vpop.f32.mrb[0].mxu0
        %347 = vdwg.mxu0
        %348 = vst [vmem:[%s233] sm:$0xff] %v345
        %s349 = sand.u32 %s121, 1
        %s350 = scalar_lea.sflag [#allocation4], %s349
        %s351 = sand.u32 %s121, 1
        %s352 = smul.addr %s351, 8
        %s353 = scalar_lea.vmem [#allocation7], %s352
        // Predicated region
        $region41: #{feat_classifier_forward.1} parent=31 // pred_check
          %p354 = pneg %p131
        $region42: #{feat_classifier_forward.1} parent=31 // pred_check_branch
          %356 = sbr.rel (%p354) target = $region44
        $region43: #{feat_classifier_forward.1} parent=31 // pred_region
          %s358 = ssub.s32 128, 128
          %359 = vsyncadd %s350, %s358
          %s360 = sadd.s32 %s26, %s25
          %s361 = smul.addr %s360, 128
          %s362 = scalar_lea.hbm %s3, %s361
          %s364 = sshll.u32 %s353, 4
          %s365 = int_to_ptr.vmem [resolvable:$true] %s364
          %367 = dma.vmem_to_hbm [thread:$0]  %s365, 128, %s362, %s350
        $region44: #{feat_classifier_forward.1} parent=31 // pred_fallthru
          _
      $region32: #{feat_classifier_forward.1} parent=5 // pred_fallthru
        _
      %p368 = scmp.le.s32.totalorder 2, %s16
      // Predicated region
      $region45: #{feat_classifier_forward.1} parent=5 // pred_check
        %p369 = pneg %p368
      $region46: #{feat_classifier_forward.1} parent=5 // pred_check_branch
        %371 = sbr.rel (%p369) target = $region48
      $region47: #{feat_classifier_forward.1} parent=5 // pred_region
        %s372 = ssub.s32 %s16, 2
        // Predicated region
        $region49: #{feat_classifier_forward.1} parent=47 // pred_check
          %p373 = pneg %p137
        $region50: #{feat_classifier_forward.1} parent=47 // pred_check_branch
          %375 = sbr.rel (%p373) target = $region52
        $region51: #{feat_classifier_forward.1} parent=47 // pred_region
          %s376 = sand.u32 %s122, 1
          %s377 = scalar_lea.sflag [#allocation4], %s376
          %s378 = sand.u32 %s122, 1
          %s379 = smul.addr %s378, 8
          %s380 = scalar_lea.vmem [#allocation7], %s379
          %381 = dma.done %s377, 128
        $region52: #{feat_classifier_forward.1} parent=47 // pred_fallthru
          _
      $region48: #{feat_classifier_forward.1} parent=5 // pred_fallthru
        _
    $region6: #{feat_classifier_forward.1} parent=1 // loop_footer
      %s20 = sadd.s32 1, %s16
    $region7: #{feat_classifier_forward.1} parent=1 // loop_footer_branch
      %15 = sbr.rel target = $region3
    $region8: #{feat_classifier_forward.1} parent=1 // loop_exit
      _
    %382 = vsyncpa [#allocation3], 1
    %s383 = scalar_lea.sflag [#allocation3], 1
    %384 = vsyncpa %s383, 1
    %385 = vsyncpa [#allocation6], 1
    %386 = vsyncpa [#allocation4], 1
    %s387 = scalar_lea.sflag [#allocation4], 1
    %388 = vsyncpa %s387, 1

</llo_original>
